<compile_context>
chip_gen: v7x
topology: tpu7x:2x2x1
jax: 0.10.0
libtpu: 0.0.40
codegen_flags: <defaults>
</compile_context>

<pallas_src>
import functools

import jax
import jax.numpy as jnp
from jax.experimental import pallas as pl
from jax.experimental.pallas import tpu as pltpu


def _attention_kernel(x_ref, q_ref, mema_ref, mbias_ref, mem_ref,
                      wf_ref, wd_ref, we_ref,
                      ctx_ref, en_ref, m_sc, l_sc, aq_sc, *, K):
    """One (batch-block, T-tile) grid step.

    x_ref    : (TB, 1, 2, TT+K-1) cum.-attention halo window for this tile
    q_ref    : (TB, H)            decoder query (resident per batch block)
    mema_ref : (TB, TT, A)        projected memory tile (bf16 stream)
    mbias_ref: (TB, TT)           additive mask bias 0 / -1e30
    mem_ref  : (TB, TT, E)        encoder memory tile (bf16 stream)
    wf_ref   : (2K, A)            fused (location conv o location linear) weight
    wd_ref   : (H, A)             decoder projection weight (transposed)
    we_ref   : (1, A)             energy weight
    ctx_ref  : (TB, E)            context output / online f32 accumulator
    en_ref   : (TB, TT)           masked energies output (per tile, lane-dense)
    m_sc,l_sc: (TB, 1)            online-softmax running max / sum
    aq_sc    : (TB, A)            cached query projection
    """
    TB, TT, A = mema_ref.shape
    f32 = jnp.float32
    t_idx = pl.program_id(1)

    @pl.when(t_idx == 0)
    def _init():
        m_sc[...] = jnp.full_like(m_sc, -1e30)
        l_sc[...] = jnp.zeros_like(l_sc)
        ctx_ref[...] = jnp.zeros_like(ctx_ref)
        # Query projection is invariant across T tiles -> compute once.
        aq_sc[...] = jnp.dot(q_ref[...].astype(f32), wd_ref[...],
                             preferred_element_type=f32)            # (TB, A)

    # Fused location conv + linear: 2K taps from this tile's halo window,
    # static lane slices (XLU) + VPU FMAs against the fused (2K, A) weight.
    # (For very large K an in-VMEM im2col + MXU matmul would cut the FMA count,
    # but the FMAs are small next to the bf16 memory/memory_after stream.)
    xw = x_ref[...].astype(f32)                                     # (TB,1,2,TT+K-1)
    wf = wf_ref[...]                                                # (2K, A)
    acc = mema_ref[...].astype(f32) + aq_sc[...][:, None, :]        # (TB, TT, A)
    for c in range(2):
        for k in range(K):
            tap = xw[:, 0, c, k:k + TT]                             # (TB, TT)
            acc = acc + tap[:, :, None] * wf[c * K + k][None, None, :]
    hidden = jnp.tanh(acc)                                          # (TB, TT, A)

    # Energy head: Linear(A -> 1) as a VPU multiply + lane reduce over A.
    mbias = mbias_ref[...]                                          # (TB, TT)
    en = jnp.sum(hidden * we_ref[...][0], axis=2) + mbias           # (TB, TT)
    en_ref[...] = en                                                # lane-dense store

    # Online-softmax context accumulation (flash style).  p is explicitly
    # zeroed at masked positions so a fully-masked tile cannot pollute l/ctx.
    m_prev = m_sc[...]                                              # (TB, 1)
    m_new = jnp.maximum(m_prev, jnp.max(en, axis=1, keepdims=True))
    alpha = jnp.exp(m_prev - m_new)
    p = jnp.where(mbias < -1e20, 0.0, jnp.exp(en - m_new))          # (TB, TT)
    l_sc[...] = alpha * l_sc[...] + jnp.sum(p, axis=1, keepdims=True)
    # VPU/XLU weighted reduce over the T tile (not a degenerate M=1 matmul).
    ctx_ref[...] = alpha * ctx_ref[...] + jnp.sum(
        p[:, :, None] * mem_ref[...].astype(f32), axis=1)           # (TB, E)
    m_sc[...] = m_new

    @pl.when(t_idx == pl.num_programs(1) - 1)
    def _finalize():
        # l == 0 only if every position of a row is masked; then inf/NaN,
        # matching the reference softmax over an all -inf row.
        ctx_ref[...] = ctx_ref[...] * pl.reciprocal(l_sc[...], approx=True)


def attention_forward(hidden_state, memory, memory_after, cum_att_weights, mask,
                      conv_w, w_loc, w_dec, w_energy, *,
                      block_b=8, block_t=128):
    """Forward pass of the PyTorch `Attention` module (context, weights)."""
    B, T, E = memory.shape
    A = memory_after.shape[-1]
    H = hidden_state.shape[-1]
    F, _, K = conv_w.shape
    assert K % 2 == 1, "only odd ('same'-padded) kernel sizes, as in the PyTorch module"
    pad = (K - 1) // 2
    f32 = jnp.float32

    # Batch axis is 'parallel' (megacore-shardable), T is the trailing
    # 'arbitrary' reduction axis.  For B > block_b, TB=8 keeps >=2 batch grid
    # steps so both v7x TensorCores get work.
    TB = B if B <= block_b else block_b
    Bp = pl.cdiv(B, TB) * TB
    TT = T if T <= block_t else block_t
    Tp = pl.cdiv(T, TT) * TT
    Gt = Tp // TT
    TWIN = TT + K - 1

    # ---- small glue in plain JAX (no big-tensor astype / no HBM im2col) ----
    # Fused weight of Conv1d(2->F, K, 'same', no bias) followed by Linear(F->A):
    #   wf[c*K + k, a] = sum_f conv_w[f, c, k] * w_loc[a, f]
    wf = jnp.einsum('fck,af->cka', conv_w.astype(f32),
                    w_loc.astype(f32)).reshape(2 * K, A)
    wd_t = jnp.transpose(w_dec).astype(f32)                          # (H, A)
    we_r = w_energy.astype(f32)                                      # (1, A)

    # Cumulative attention weights: zero-pad once for the 'same' conv and the
    # T tiling, then cut per-tile halo windows (~1x the original size).
    xpad = jnp.pad(cum_att_weights,
                   ((0, 0), (0, 0), (pad, (Tp - T) + (K - 1 - pad))))  # (B,2,Tp+K-1)
    xwin = jnp.stack([xpad[:, :, g * TT: g * TT + TWIN] for g in range(Gt)],
                     axis=1)                                          # (B,Gt,2,TWIN)

    # Additive mask bias (0 / -1e30); padded T tail is masked out.
    if mask is None:
        mbias = jnp.zeros((B, T), f32)
    else:
        mbias = jnp.where(mask, f32(-1e30), f32(0.0))
    mbias = jnp.pad(mbias, ((0, 0), (0, Tp - T)), constant_values=-1e30)

    if Tp != T:
        memory = jnp.pad(memory, ((0, 0), (0, Tp - T), (0, 0)))
        memory_after = jnp.pad(memory_after, ((0, 0), (0, Tp - T), (0, 0)))
    if Bp != B:
        pb = Bp - B
        hidden_state = jnp.pad(hidden_state, ((0, pb), (0, 0)))
        memory = jnp.pad(memory, ((0, pb), (0, 0), (0, 0)))
        memory_after = jnp.pad(memory_after, ((0, pb), (0, 0), (0, 0)))
        xwin = jnp.pad(xwin, ((0, pb), (0, 0), (0, 0), (0, 0)))
        mbias = jnp.pad(mbias, ((0, pb), (0, 0)), constant_values=-1e30)

    grid_spec = pltpu.PrefetchScalarGridSpec(
        num_scalar_prefetch=0,
        grid=(Bp // TB, Gt),
        in_specs=[
            pl.BlockSpec((TB, 1, 2, TWIN), lambda b, t: (b, t, 0, 0)),  # cum.-weight halo window
            pl.BlockSpec((TB, H), lambda b, t: (b, 0)),                 # query (resident)
            pl.BlockSpec((TB, TT, A), lambda b, t: (b, t, 0)),          # projected memory tile (bf16)
            pl.BlockSpec((TB, TT), lambda b, t: (b, t)),                # mask bias tile
            pl.BlockSpec((TB, TT, E), lambda b, t: (b, t, 0)),          # memory tile (bf16)
            pl.BlockSpec((2 * K, A), lambda b, t: (0, 0)),              # fused conv+loc weight
            pl.BlockSpec((H, A), lambda b, t: (0, 0)),                  # decoder linear
            pl.BlockSpec((1, A), lambda b, t: (0, 0)),                  # energy linear
        ],
        out_specs=[
            pl.BlockSpec((TB, E), lambda b, t: (b, 0)),                 # context (resident acc.)
            pl.BlockSpec((TB, TT), lambda b, t: (b, t)),                # masked energies (tiled)
        ],
        scratch_shapes=[
            pltpu.VMEM((TB, 1), jnp.float32),                           # running max
            pltpu.VMEM((TB, 1), jnp.float32),                           # running sum
            pltpu.VMEM((TB, A), jnp.float32),                           # cached query projection
        ],
    )

    ctx, energies = pl.pallas_call(
        functools.partial(_attention_kernel, K=K),
        out_shape=(jax.ShapeDtypeStruct((Bp, E), f32),
                   jax.ShapeDtypeStruct((Bp, Tp), f32)),
        grid_spec=grid_spec,
        compiler_params=pltpu.CompilerParams(
            dimension_semantics=("parallel", "arbitrary")),
    )(xwin, hidden_state, memory_after, mbias, memory, wf, wd_t, we_r)

    # Final softmax normalization over the (B, T) masked energies: a negligible
    # XLA epilogue (<1% of the HBM bytes of the memory/memory_after streams).
    weights = jax.nn.softmax(energies[:B, :T], axis=1)

    # TODO(synk): if this runs once per decoder step, keep memory/memory_after
    # resident across calls (cross-call VMEM residency / multi-step fusion)
    # instead of re-streaming them from HBM every step.
    return ctx[:B], weights


if __name__ == "__main__":
    B, T = 2, 16
    H, E, A = 32, 16, 32        # rnn_hidden_dim, in_emb_dim, out_att_dim
    F, K = 8, 5                 # in_channels (location filters), kernel_size

    key = jax.random.PRNGKey(0)
    ks = jax.random.split(key, 8)

    hidden_state = jax.random.normal(ks[0], (B, H), jnp.float32)
    # Encoder-side tensors are the dominant HBM stream: keep them bf16
    # end-to-end (no wrapper up-cast; the kernel casts after the DMA).
    memory = jax.random.normal(ks[1], (B, T, E), jnp.float32).astype(jnp.bfloat16)
    memory_after = jax.random.normal(ks[2], (B, T, A), jnp.float32).astype(jnp.bfloat16)
    cum_w = jax.random.uniform(ks[3], (B, 2, T), jnp.float32)
    mask = jnp.zeros((B, T), dtype=bool).at[1, T - 3:].set(True)

    # Deterministic xavier-uniform-ish init (tanh gain for the 'tanh' layers).
    def xavier(k, shape, fan_in, fan_out, gain=1.0):
        lim = gain * jnp.sqrt(6.0 / (fan_in + fan_out))
        return jax.random.uniform(k, shape, jnp.float32, -lim, lim)

    gain_tanh = 5.0 / 3.0
    conv_w = xavier(ks[4], (F, 2, K), 2 * K, F * K)            # Conv1d(2 -> F, K), no bias
    w_loc = xavier(ks[5], (A, F), F, A, gain_tanh)             # Linear(F -> A), no bias
    w_dec = xavier(ks[6], (A, H), H, A, gain_tanh)             # Linear(H -> A), no bias
    w_energy = xavier(ks[7], (1, A), A, 1)                     # Linear(A -> 1), no bias

    ctx, weights = attention_forward(hidden_state, memory, memory_after,
                                     cum_w, mask, conv_w, w_loc, w_dec, w_energy)
    jax.block_until_ready((ctx, weights))

    # Pure-JAX reference of the PyTorch forward (f32 math, fed the same
    # bf16-rounded encoder tensors the kernel streams).
    def ref_forward():
        pad = (K - 1) // 2
        mem32 = memory.astype(jnp.float32)
        mema32 = memory_after.astype(jnp.float32)
        conv = jax.lax.conv_general_dilated(
            cum_w, conv_w, window_strides=(1,),
            padding=[(pad, K - 1 - pad)],
            dimension_numbers=("NCH", "OIH", "NCH"))             # (B, F, T)
        after_w = jnp.einsum("bft,af->bta", conv, w_loc)         # (B, T, A)
        after_q = jnp.einsum("bh,ah->ba", hidden_state, w_dec)[:, None, :]
        hid = jnp.tanh(after_q + after_w + mema32)
        en = jnp.einsum("bta,a->bt", hid, w_energy[0])
        en = jnp.where(mask, -jnp.inf, en)
        w = jax.nn.softmax(en, axis=1)
        c = jnp.einsum("bt,bte->be", w, mem32)
        return c, w

    ref_ctx, ref_w = ref_forward()
    # bf16 streams + EUP approx reciprocal => slightly loosened tolerances.
    assert jnp.allclose(ctx, ref_ctx, atol=2e-3, rtol=2e-3), "context mismatch"
    assert jnp.allclose(weights, ref_w, atol=2e-3, rtol=2e-3), "weights mismatch"
    print("KERNEL_OK")
</pallas_src>

<mosaic_0001>
module attributes {stable_mosaic.version = 11 : i64} {
  func.func @_attention_kernel(%arg0: i32, %arg1: i32, %arg2: memref<2x1x2x20xf32, #tpu.memory_space<vmem>>, %arg3: memref<2x32xf32, #tpu.memory_space<vmem>>, %arg4: memref<2x16x32xbf16, #tpu.memory_space<vmem>>, %arg5: memref<2x16xf32, #tpu.memory_space<vmem>>, %arg6: memref<2x16x16xbf16, #tpu.memory_space<vmem>>, %arg7: memref<10x32xf32, #tpu.memory_space<vmem>>, %arg8: memref<32x32xf32, #tpu.memory_space<vmem>>, %arg9: memref<1x32xf32, #tpu.memory_space<vmem>>, %arg10: memref<2x16xf32, #tpu.memory_space<vmem>>, %arg11: memref<2x16xf32, #tpu.memory_space<vmem>>, %arg12: memref<2x1xf32, #tpu.memory_space<vmem>>, %arg13: memref<2x1xf32, #tpu.memory_space<vmem>>, %arg14: memref<2x32xf32, #tpu.memory_space<vmem>>) attributes {dimension_semantics = [#tpu.dimension_semantics<parallel>, #tpu.dimension_semantics<arbitrary>], iteration_bounds = array<i64: 1, 1>, scalar_prefetch = 0 : i64, scratch_operands = 3 : i64, tpu.core_type = #tpu.core_type<tc>, window_params = [{transform_indices = @transform_0, window_bounds = array<i64: 2, 1, 2, 20>}, {transform_indices = @transform_1, window_bounds = array<i64: 2, 32>}, {transform_indices = @transform_2, window_bounds = array<i64: 2, 16, 32>}, {transform_indices = @transform_3, window_bounds = array<i64: 2, 16>}, {transform_indices = @transform_4, window_bounds = array<i64: 2, 16, 16>}, {pipeline_mode = #tpu.pipeline_mode<synchronous>, transform_indices = @transform_5, window_bounds = array<i64: 10, 32>}, {pipeline_mode = #tpu.pipeline_mode<synchronous>, transform_indices = @transform_6, window_bounds = array<i64: 32, 32>}, {pipeline_mode = #tpu.pipeline_mode<synchronous>, transform_indices = @transform_7, window_bounds = array<i64: 1, 32>}, {transform_indices = @transform_8, window_bounds = array<i64: 2, 16>}, {transform_indices = @transform_9, window_bounds = array<i64: 2, 16>}]} {
    %c0_i32 = arith.constant 0 : i32
    %0 = arith.cmpi eq, %arg1, %c0_i32 : i32
    %1 = arith.extui %0 : i1 to i32
    %c0_i32_0 = arith.constant 0 : i32
    %2 = arith.cmpi ne, %1, %c0_i32_0 : i32
    scf.if %2 {
      %cst_39 = arith.constant -1.000000e+30 : f32
      %155 = vector.broadcast %cst_39 : f32 to vector<2x1xf32>
      %c0_40 = arith.constant 0 : index
      %c0_41 = arith.constant 0 : index
      %156 = vector.load %arg12[%c0_40, %c0_41] : memref<2x1xf32, #tpu.memory_space<vmem>>, vector<2x1xf32>
      tpu.vector_store %arg12[%c0_40, %c0_41], %155 {strides = array<i32>} : memref<2x1xf32, #tpu.memory_space<vmem>>, vector<2x1xf32>,
      %cst_42 = arith.constant 0.000000e+00 : f32
      %157 = vector.broadcast %cst_42 : f32 to vector<2x1xf32>
      %c0_43 = arith.constant 0 : index
      %c0_44 = arith.constant 0 : index
      %158 = vector.load %arg13[%c0_43, %c0_44] : memref<2x1xf32, #tpu.memory_space<vmem>>, vector<2x1xf32>
      tpu.vector_store %arg13[%c0_43, %c0_44], %157 {strides = array<i32>} : memref<2x1xf32, #tpu.memory_space<vmem>>, vector<2x1xf32>,
      %cst_45 = arith.constant 0.000000e+00 : f32
      %159 = vector.broadcast %cst_45 : f32 to vector<2x16xf32>
      %c0_46 = arith.constant 0 : index
      %c0_47 = arith.constant 0 : index
      %160 = vector.load %arg10[%c0_46, %c0_47] : memref<2x16xf32, #tpu.memory_space<vmem>>, vector<2x16xf32>
      tpu.vector_store %arg10[%c0_46, %c0_47], %159 {strides = array<i32>} : memref<2x16xf32, #tpu.memory_space<vmem>>, vector<2x16xf32>,
      %c0_48 = arith.constant 0 : index
      %c0_49 = arith.constant 0 : index
      %161 = vector.load %arg3[%c0_48, %c0_49] : memref<2x32xf32, #tpu.memory_space<vmem>>, vector<2x32xf32>
      %c0_50 = arith.constant 0 : index
      %c0_51 = arith.constant 0 : index
      %162 = vector.load %arg8[%c0_50, %c0_51] : memref<32x32xf32, #tpu.memory_space<vmem>>, vector<32x32xf32>
      %cst_52 = arith.constant dense<0.000000e+00> : vector<2x32xf32>
      %163 = tpu.matmul %161, %162, %cst_52 {dimension_numbers = #tpu.dot_dimension_numbers<[1], [0], [0], [1], [0, 0, 1, 1], [], []>} : vector<2x32xf32>, vector<32x32xf32>, vector<2x32xf32> -> vector<2x32xf32>
      %c0_53 = arith.constant 0 : index
      %c0_54 = arith.constant 0 : index
      %164 = vector.load %arg14[%c0_53, %c0_54] : memref<2x32xf32, #tpu.memory_space<vmem>>, vector<2x32xf32>
      tpu.vector_store %arg14[%c0_53, %c0_54], %163 {strides = array<i32>} : memref<2x32xf32, #tpu.memory_space<vmem>>, vector<2x32xf32>,
    } else {
    }
    %c0 = arith.constant 0 : index
    %c0_1 = arith.constant 0 : index
    %c0_2 = arith.constant 0 : index
    %c0_3 = arith.constant 0 : index
    %3 = vector.load %arg2[%c0, %c0_1, %c0_2, %c0_3] : memref<2x1x2x20xf32, #tpu.memory_space<vmem>>, vector<2x1x2x20xf32>
    %c0_4 = arith.constant 0 : index
    %c0_5 = arith.constant 0 : index
    %4 = vector.load %arg7[%c0_4, %c0_5] : memref<10x32xf32, #tpu.memory_space<vmem>>, vector<10x32xf32>
    %c0_6 = arith.constant 0 : index
    %c0_7 = arith.constant 0 : index
    %c0_8 = arith.constant 0 : index
    %5 = vector.load %arg4[%c0_6, %c0_7, %c0_8] : memref<2x16x32xbf16, #tpu.memory_space<vmem>>, vector<2x16x32xbf16>
    %6 = arith.extf %5 : vector<2x16x32xbf16> to vector<2x16x32xf32>
    %c0_9 = arith.constant 0 : index
    %c0_10 = arith.constant 0 : index
    %7 = vector.load %arg14[%c0_9, %c0_10] : memref<2x32xf32, #tpu.memory_space<vmem>>, vector<2x32xf32>
    %8 = vector.shape_cast %7 : vector<2x32xf32> to vector<2x1x32xf32>
    %9 = vector.broadcast %8 : vector<2x1x32xf32> to vector<2x16x32xf32>
    %10 = arith.addf %6, %9 : vector<2x16x32xf32>
    %11 = vector.extract_strided_slice %3 {offsets = [0, 0, 0, 0], sizes = [2, 1, 1, 16], strides = [1, 1, 1, 1]} : vector<2x1x2x20xf32> to vector<2x1x1x16xf32>
    %12 = vector.shape_cast %11 : vector<2x1x1x16xf32> to vector<2x16xf32>
    %13 = vector.shape_cast %12 : vector<2x16xf32> to vector<2x16x1xf32>
    %14 = vector.extract_strided_slice %4 {offsets = [0, 0], sizes = [1, 32], strides = [1, 1]} : vector<10x32xf32> to vector<1x32xf32>
    %15 = vector.shape_cast %14 : vector<1x32xf32> to vector<32xf32>
    %16 = vector.shape_cast %15 : vector<32xf32> to vector<1x1x32xf32>
    %17 = vector.broadcast %13 : vector<2x16x1xf32> to vector<2x16x32xf32>
    %18 = vector.broadcast %16 : vector<1x1x32xf32> to vector<2x16x32xf32>
    %19 = arith.mulf %17, %18 : vector<2x16x32xf32>
    %20 = arith.addf %10, %19 : vector<2x16x32xf32>
    %21 = vector.extract_strided_slice %3 {offsets = [0, 0, 0, 1], sizes = [2, 1, 1, 16], strides = [1, 1, 1, 1]} : vector<2x1x2x20xf32> to vector<2x1x1x16xf32>
    %22 = vector.shape_cast %21 : vector<2x1x1x16xf32> to vector<2x16xf32>
    %23 = vector.shape_cast %22 : vector<2x16xf32> to vector<2x16x1xf32>
    %24 = vector.extract_strided_slice %4 {offsets = [1, 0], sizes = [1, 32], strides = [1, 1]} : vector<10x32xf32> to vector<1x32xf32>
    %25 = vector.shape_cast %24 : vector<1x32xf32> to vector<32xf32>
    %26 = vector.shape_cast %25 : vector<32xf32> to vector<1x1x32xf32>
    %27 = vector.broadcast %23 : vector<2x16x1xf32> to vector<2x16x32xf32>
    %28 = vector.broadcast %26 : vector<1x1x32xf32> to vector<2x16x32xf32>
    %29 = arith.mulf %27, %28 : vector<2x16x32xf32>
    %30 = arith.addf %20, %29 : vector<2x16x32xf32>
    %31 = vector.extract_strided_slice %3 {offsets = [0, 0, 0, 2], sizes = [2, 1, 1, 16], strides = [1, 1, 1, 1]} : vector<2x1x2x20xf32> to vector<2x1x1x16xf32>
    %32 = vector.shape_cast %31 : vector<2x1x1x16xf32> to vector<2x16xf32>
    %33 = vector.shape_cast %32 : vector<2x16xf32> to vector<2x16x1xf32>
    %34 = vector.extract_strided_slice %4 {offsets = [2, 0], sizes = [1, 32], strides = [1, 1]} : vector<10x32xf32> to vector<1x32xf32>
    %35 = vector.shape_cast %34 : vector<1x32xf32> to vector<32xf32>
    %36 = vector.shape_cast %35 : vector<32xf32> to vector<1x1x32xf32>
    %37 = vector.broadcast %33 : vector<2x16x1xf32> to vector<2x16x32xf32>
    %38 = vector.broadcast %36 : vector<1x1x32xf32> to vector<2x16x32xf32>
    %39 = arith.mulf %37, %38 : vector<2x16x32xf32>
    %40 = arith.addf %30, %39 : vector<2x16x32xf32>
    %41 = vector.extract_strided_slice %3 {offsets = [0, 0, 0, 3], sizes = [2, 1, 1, 16], strides = [1, 1, 1, 1]} : vector<2x1x2x20xf32> to vector<2x1x1x16xf32>
    %42 = vector.shape_cast %41 : vector<2x1x1x16xf32> to vector<2x16xf32>
    %43 = vector.shape_cast %42 : vector<2x16xf32> to vector<2x16x1xf32>
    %44 = vector.extract_strided_slice %4 {offsets = [3, 0], sizes = [1, 32], strides = [1, 1]} : vector<10x32xf32> to vector<1x32xf32>
    %45 = vector.shape_cast %44 : vector<1x32xf32> to vector<32xf32>
    %46 = vector.shape_cast %45 : vector<32xf32> to vector<1x1x32xf32>
    %47 = vector.broadcast %43 : vector<2x16x1xf32> to vector<2x16x32xf32>
    %48 = vector.broadcast %46 : vector<1x1x32xf32> to vector<2x16x32xf32>
    %49 = arith.mulf %47, %48 : vector<2x16x32xf32>
    %50 = arith.addf %40, %49 : vector<2x16x32xf32>
    %51 = vector.extract_strided_slice %3 {offsets = [0, 0, 0, 4], sizes = [2, 1, 1, 16], strides = [1, 1, 1, 1]} : vector<2x1x2x20xf32> to vector<2x1x1x16xf32>
    %52 = vector.shape_cast %51 : vector<2x1x1x16xf32> to vector<2x16xf32>
    %53 = vector.shape_cast %52 : vector<2x16xf32> to vector<2x16x1xf32>
    %54 = vector.extract_strided_slice %4 {offsets = [4, 0], sizes = [1, 32], strides = [1, 1]} : vector<10x32xf32> to vector<1x32xf32>
    %55 = vector.shape_cast %54 : vector<1x32xf32> to vector<32xf32>
    %56 = vector.shape_cast %55 : vector<32xf32> to vector<1x1x32xf32>
    %57 = vector.broadcast %53 : vector<2x16x1xf32> to vector<2x16x32xf32>
    %58 = vector.broadcast %56 : vector<1x1x32xf32> to vector<2x16x32xf32>
    %59 = arith.mulf %57, %58 : vector<2x16x32xf32>
    %60 = arith.addf %50, %59 : vector<2x16x32xf32>
    %61 = vector.extract_strided_slice %3 {offsets = [0, 0, 1, 0], sizes = [2, 1, 1, 16], strides = [1, 1, 1, 1]} : vector<2x1x2x20xf32> to vector<2x1x1x16xf32>
    %62 = vector.shape_cast %61 : vector<2x1x1x16xf32> to vector<2x16xf32>
    %63 = vector.shape_cast %62 : vector<2x16xf32> to vector<2x16x1xf32>
    %64 = vector.extract_strided_slice %4 {offsets = [5, 0], sizes = [1, 32], strides = [1, 1]} : vector<10x32xf32> to vector<1x32xf32>
    %65 = vector.shape_cast %64 : vector<1x32xf32> to vector<32xf32>
    %66 = vector.shape_cast %65 : vector<32xf32> to vector<1x1x32xf32>
    %67 = vector.broadcast %63 : vector<2x16x1xf32> to vector<2x16x32xf32>
    %68 = vector.broadcast %66 : vector<1x1x32xf32> to vector<2x16x32xf32>
    %69 = arith.mulf %67, %68 : vector<2x16x32xf32>
    %70 = arith.addf %60, %69 : vector<2x16x32xf32>
    %71 = vector.extract_strided_slice %3 {offsets = [0, 0, 1, 1], sizes = [2, 1, 1, 16], strides = [1, 1, 1, 1]} : vector<2x1x2x20xf32> to vector<2x1x1x16xf32>
    %72 = vector.shape_cast %71 : vector<2x1x1x16xf32> to vector<2x16xf32>
    %73 = vector.shape_cast %72 : vector<2x16xf32> to vector<2x16x1xf32>
    %74 = vector.extract_strided_slice %4 {offsets = [6, 0], sizes = [1, 32], strides = [1, 1]} : vector<10x32xf32> to vector<1x32xf32>
    %75 = vector.shape_cast %74 : vector<1x32xf32> to vector<32xf32>
    %76 = vector.shape_cast %75 : vector<32xf32> to vector<1x1x32xf32>
    %77 = vector.broadcast %73 : vector<2x16x1xf32> to vector<2x16x32xf32>
    %78 = vector.broadcast %76 : vector<1x1x32xf32> to vector<2x16x32xf32>
    %79 = arith.mulf %77, %78 : vector<2x16x32xf32>
    %80 = arith.addf %70, %79 : vector<2x16x32xf32>
    %81 = vector.extract_strided_slice %3 {offsets = [0, 0, 1, 2], sizes = [2, 1, 1, 16], strides = [1, 1, 1, 1]} : vector<2x1x2x20xf32> to vector<2x1x1x16xf32>
    %82 = vector.shape_cast %81 : vector<2x1x1x16xf32> to vector<2x16xf32>
    %83 = vector.shape_cast %82 : vector<2x16xf32> to vector<2x16x1xf32>
    %84 = vector.extract_strided_slice %4 {offsets = [7, 0], sizes = [1, 32], strides = [1, 1]} : vector<10x32xf32> to vector<1x32xf32>
    %85 = vector.shape_cast %84 : vector<1x32xf32> to vector<32xf32>
    %86 = vector.shape_cast %85 : vector<32xf32> to vector<1x1x32xf32>
    %87 = vector.broadcast %83 : vector<2x16x1xf32> to vector<2x16x32xf32>
    %88 = vector.broadcast %86 : vector<1x1x32xf32> to vector<2x16x32xf32>
    %89 = arith.mulf %87, %88 : vector<2x16x32xf32>
    %90 = arith.addf %80, %89 : vector<2x16x32xf32>
    %91 = vector.extract_strided_slice %3 {offsets = [0, 0, 1, 3], sizes = [2, 1, 1, 16], strides = [1, 1, 1, 1]} : vector<2x1x2x20xf32> to vector<2x1x1x16xf32>
    %92 = vector.shape_cast %91 : vector<2x1x1x16xf32> to vector<2x16xf32>
    %93 = vector.shape_cast %92 : vector<2x16xf32> to vector<2x16x1xf32>
    %94 = vector.extract_strided_slice %4 {offsets = [8, 0], sizes = [1, 32], strides = [1, 1]} : vector<10x32xf32> to vector<1x32xf32>
    %95 = vector.shape_cast %94 : vector<1x32xf32> to vector<32xf32>
    %96 = vector.shape_cast %95 : vector<32xf32> to vector<1x1x32xf32>
    %97 = vector.broadcast %93 : vector<2x16x1xf32> to vector<2x16x32xf32>
    %98 = vector.broadcast %96 : vector<1x1x32xf32> to vector<2x16x32xf32>
    %99 = arith.mulf %97, %98 : vector<2x16x32xf32>
    %100 = arith.addf %90, %99 : vector<2x16x32xf32>
    %101 = vector.extract_strided_slice %3 {offsets = [0, 0, 1, 4], sizes = [2, 1, 1, 16], strides = [1, 1, 1, 1]} : vector<2x1x2x20xf32> to vector<2x1x1x16xf32>
    %102 = vector.shape_cast %101 : vector<2x1x1x16xf32> to vector<2x16xf32>
    %103 = vector.shape_cast %102 : vector<2x16xf32> to vector<2x16x1xf32>
    %104 = vector.extract_strided_slice %4 {offsets = [9, 0], sizes = [1, 32], strides = [1, 1]} : vector<10x32xf32> to vector<1x32xf32>
    %105 = vector.shape_cast %104 : vector<1x32xf32> to vector<32xf32>
    %106 = vector.shape_cast %105 : vector<32xf32> to vector<1x1x32xf32>
    %107 = vector.broadcast %103 : vector<2x16x1xf32> to vector<2x16x32xf32>
    %108 = vector.broadcast %106 : vector<1x1x32xf32> to vector<2x16x32xf32>
    %109 = arith.mulf %107, %108 : vector<2x16x32xf32>
    %110 = arith.addf %100, %109 : vector<2x16x32xf32>
    %111 = math.tanh %110 : vector<2x16x32xf32>
    %c0_11 = arith.constant 0 : index
    %c0_12 = arith.constant 0 : index
    %112 = vector.load %arg5[%c0_11, %c0_12] : memref<2x16xf32, #tpu.memory_space<vmem>>, vector<2x16xf32>
    %c0_13 = arith.constant 0 : index
    %c0_14 = arith.constant 0 : index
    %113 = vector.load %arg9[%c0_13, %c0_14] : memref<1x32xf32, #tpu.memory_space<vmem>>, vector<1x32xf32>
    %114 = vector.shape_cast %113 : vector<1x32xf32> to vector<32xf32>
    %115 = vector.shape_cast %114 : vector<32xf32> to vector<1x1x32xf32>
    %116 = vector.broadcast %115 : vector<1x1x32xf32> to vector<2x16x32xf32>
    %117 = arith.mulf %111, %116 : vector<2x16x32xf32>
    %cst = arith.constant dense<0.000000e+00> : vector<2x16xf32>
    %118 = vector.multi_reduction <add>, %117, %cst [2] : vector<2x16x32xf32> to vector<2x16xf32>
    %119 = arith.addf %118, %112 : vector<2x16xf32>
    %c0_15 = arith.constant 0 : index
    %c0_16 = arith.constant 0 : index
    %120 = vector.load %arg11[%c0_15, %c0_16] : memref<2x16xf32, #tpu.memory_space<vmem>>, vector<2x16xf32>
    tpu.vector_store %arg11[%c0_15, %c0_16], %119 {strides = array<i32>} : memref<2x16xf32, #tpu.memory_space<vmem>>, vector<2x16xf32>,
    %c0_17 = arith.constant 0 : index
    %c0_18 = arith.constant 0 : index
    %121 = vector.load %arg12[%c0_17, %c0_18] : memref<2x1xf32, #tpu.memory_space<vmem>>, vector<2x1xf32>
    %cst_19 = arith.constant dense<0xFF800000> : vector<2xf32>
    %122 = vector.multi_reduction <maximumf>, %119, %cst_19 [1] : vector<2x16xf32> to vector<2xf32>
    %123 = vector.shape_cast %122 : vector<2xf32> to vector<2x1xf32>
    %124 = arith.maximumf %121, %123 : vector<2x1xf32>
    %125 = arith.subf %121, %124 : vector<2x1xf32>
    %126 = math.exp %125 : vector<2x1xf32>
    %cst_20 = arith.constant -1.000000e+20 : f32
    %127 = vector.broadcast %cst_20 : f32 to vector<2x16xf32>
    %128 = arith.cmpf olt, %112, %127 : vector<2x16xf32>
    %129 = vector.broadcast %124 : vector<2x1xf32> to vector<2x16xf32>
    %130 = arith.subf %119, %129 : vector<2x16xf32>
    %131 = math.exp %130 : vector<2x16xf32>
    %cst_21 = arith.constant 0.000000e+00 : f32
    %132 = vector.broadcast %cst_21 : f32 to vector<2x16xf32>
    %133 = arith.select %128, %132, %131 : vector<2x16xi1>, vector<2x16xf32>
    %c0_22 = arith.constant 0 : index
    %c0_23 = arith.constant 0 : index
    %134 = vector.load %arg13[%c0_22, %c0_23] : memref<2x1xf32, #tpu.memory_space<vmem>>, vector<2x1xf32>
    %135 = arith.mulf %126, %134 : vector<2x1xf32>
    %cst_24 = arith.constant dense<0.000000e+00> : vector<2xf32>
    %136 = vector.multi_reduction <add>, %133, %cst_24 [1] : vector<2x16xf32> to vector<2xf32>
    %137 = vector.shape_cast %136 : vector<2xf32> to vector<2x1xf32>
    %138 = arith.addf %135, %137 : vector<2x1xf32>
    %c0_25 = arith.constant 0 : index
    %c0_26 = arith.constant 0 : index
    %139 = vector.load %arg13[%c0_25, %c0_26] : memref<2x1xf32, #tpu.memory_space<vmem>>, vector<2x1xf32>
    tpu.vector_store %arg13[%c0_25, %c0_26], %138 {strides = array<i32>} : memref<2x1xf32, #tpu.memory_space<vmem>>, vector<2x1xf32>,
    %c0_27 = arith.constant 0 : index
    %c0_28 = arith.constant 0 : index
    %140 = vector.load %arg10[%c0_27, %c0_28] : memref<2x16xf32, #tpu.memory_space<vmem>>, vector<2x16xf32>
    %141 = vector.broadcast %126 : vector<2x1xf32> to vector<2x16xf32>
    %142 = arith.mulf %141, %140 : vector<2x16xf32>
    %143 = vector.shape_cast %133 : vector<2x16xf32> to vector<2x16x1xf32>
    %c0_29 = arith.constant 0 : index
    %c0_30 = arith.constant 0 : index
    %c0_31 = arith.constant 0 : index
    %144 = vector.load %arg6[%c0_29, %c0_30, %c0_31] : memref<2x16x16xbf16, #tpu.memory_space<vmem>>, vector<2x16x16xbf16>
    %145 = arith.extf %144 : vector<2x16x16xbf16> to vector<2x16x16xf32>
    %146 = vector.broadcast %143 : vector<2x16x1xf32> to vector<2x16x16xf32>
    %147 = arith.mulf %146, %145 : vector<2x16x16xf32>
    %cst_32 = arith.constant dense<0.000000e+00> : vector<2x16xf32>
    %148 = vector.multi_reduction <add>, %147, %cst_32 [1] : vector<2x16x16xf32> to vector<2x16xf32>
    %149 = arith.addf %142, %148 : vector<2x16xf32>
    %c0_33 = arith.constant 0 : index
    %c0_34 = arith.constant 0 : index
    %150 = vector.load %arg10[%c0_33, %c0_34] : memref<2x16xf32, #tpu.memory_space<vmem>>, vector<2x16xf32>
    tpu.vector_store %arg10[%c0_33, %c0_34], %149 {strides = array<i32>} : memref<2x16xf32, #tpu.memory_space<vmem>>, vector<2x16xf32>,
    %c0_35 = arith.constant 0 : index
    %c0_36 = arith.constant 0 : index
    %151 = vector.load %arg12[%c0_35, %c0_36] : memref<2x1xf32, #tpu.memory_space<vmem>>, vector<2x1xf32>
    tpu.vector_store %arg12[%c0_35, %c0_36], %124 {strides = array<i32>} : memref<2x1xf32, #tpu.memory_space<vmem>>, vector<2x1xf32>,
    %c0_i32_37 = arith.constant 0 : i32
    %152 = arith.cmpi eq, %arg1, %c0_i32_37 : i32
    %153 = arith.extui %152 : i1 to i32
    %c0_i32_38 = arith.constant 0 : i32
    %154 = arith.cmpi ne, %153, %c0_i32_38 : i32
    scf.if %154 {
      %c0_39 = arith.constant 0 : index
      %c0_40 = arith.constant 0 : index
      %155 = vector.load %arg10[%c0_39, %c0_40] : memref<2x16xf32, #tpu.memory_space<vmem>>, vector<2x16xf32>
      %c0_41 = arith.constant 0 : index
      %c0_42 = arith.constant 0 : index
      %156 = vector.load %arg13[%c0_41, %c0_42] : memref<2x1xf32, #tpu.memory_space<vmem>>, vector<2x1xf32>
      %157 = tpu.reciprocal %156 {approx = true} : vector<2x1xf32> -> vector<2x1xf32>
      %158 = vector.broadcast %157 : vector<2x1xf32> to vector<2x16xf32>
      %159 = arith.mulf %155, %158 : vector<2x16xf32>
      %c0_43 = arith.constant 0 : index
      %c0_44 = arith.constant 0 : index
      %160 = vector.load %arg10[%c0_43, %c0_44] : memref<2x16xf32, #tpu.memory_space<vmem>>, vector<2x16xf32>
      tpu.vector_store %arg10[%c0_43, %c0_44], %159 {strides = array<i32>} : memref<2x16xf32, #tpu.memory_space<vmem>>, vector<2x16xf32>,
    } else {
    }
    return
  }
  func.func @transform_0(%arg0: i32, %arg1: i32) -> (i32, i32, i32, i32) {
    %c0_i32 = arith.constant 0 : i32
    %c0_i32_0 = arith.constant 0 : i32
    %c0_i32_1 = arith.constant 0 : i32
    return %arg0, %arg1, %c0_i32, %c0_i32_0 : i32, i32, i32, i32
  }
  func.func @transform_1(%arg0: i32, %arg1: i32) -> (i32, i32) {
    %c0_i32 = arith.constant 0 : i32
    %c0_i32_0 = arith.constant 0 : i32
    return %arg0, %c0_i32 : i32, i32
  }
  func.func @transform_2(%arg0: i32, %arg1: i32) -> (i32, i32, i32) {
    %c0_i32 = arith.constant 0 : i32
    %c0_i32_0 = arith.constant 0 : i32
    return %arg0, %arg1, %c0_i32 : i32, i32, i32
  }
  func.func @transform_3(%arg0: i32, %arg1: i32) -> (i32, i32) {
    %c0_i32 = arith.constant 0 : i32
    return %arg0, %arg1 : i32, i32
  }
  func.func @transform_4(%arg0: i32, %arg1: i32) -> (i32, i32, i32) {
    %c0_i32 = arith.constant 0 : i32
    %c0_i32_0 = arith.constant 0 : i32
    return %arg0, %arg1, %c0_i32 : i32, i32, i32
  }
  func.func @transform_5(%arg0: i32, %arg1: i32) -> (i32, i32) {
    %c0_i32 = arith.constant 0 : i32
    %c0_i32_0 = arith.constant 0 : i32
    %c0_i32_1 = arith.constant 0 : i32
    return %c0_i32, %c0_i32_0 : i32, i32
  }
  func.func @transform_6(%arg0: i32, %arg1: i32) -> (i32, i32) {
    %c0_i32 = arith.constant 0 : i32
    %c0_i32_0 = arith.constant 0 : i32
    %c0_i32_1 = arith.constant 0 : i32
    return %c0_i32, %c0_i32_0 : i32, i32
  }
  func.func @transform_7(%arg0: i32, %arg1: i32) -> (i32, i32) {
    %c0_i32 = arith.constant 0 : i32
    %c0_i32_0 = arith.constant 0 : i32
    %c0_i32_1 = arith.constant 0 : i32
    return %c0_i32, %c0_i32_0 : i32, i32
  }
  func.func @transform_8(%arg0: i32, %arg1: i32) -> (i32, i32) {
    %c0_i32 = arith.constant 0 : i32
    %c0_i32_0 = arith.constant 0 : i32
    return %arg0, %c0_i32 : i32, i32
  }
  func.func @transform_9(%arg0: i32, %arg1: i32) -> (i32, i32) {
    %c0_i32 = arith.constant 0 : i32
    return %arg0, %arg1 : i32, i32
  }
}

</mosaic_0001>

<llo_original>
// kernel: tpu_custom_call.1
$region0: #{tpu_custom_call.1}
  #allocation0 [shape = 'u32[]', space=smem, size = 0x4, offset = 0x4, fixed_abs, tag = 'smem constant byte address 0x4 - core index']
  #allocation1 [shape = 'u32[144,128]{1,0:T(1,128)}', space=vmem, size = 0x12000, scoped, tag = 'internal scratch']
  #allocation2 [shape = 'f32[2,1]{1,0:T(2,128)}', space=vmem, size = 0x400, scoped, tag = 'scratch operand']
  #allocation3 [shape = 'f32[2,1]{1,0:T(2,128)}', space=vmem, size = 0x400, scoped, tag = 'scratch operand']
  #allocation4 [shape = 'f32[2,32]{1,0:T(2,128)}', space=vmem, size = 0x400, scoped, tag = 'scratch operand']
  %s0 = inlined_call_operand.hbm [shape: f32[2,1,2,20], index: 0, kind: input, shape index: {}]
  %s1 = inlined_call_operand.vmem [shape: f32[2,32], index: 1, kind: input, shape index: {}]
  %s2 = inlined_call_operand.hbm [shape: bf16[2,16,32], index: 2, kind: input, shape index: {}]
  %s3 = inlined_call_operand.hbm [shape: f32[2,16], index: 3, kind: input, shape index: {}]
  %s4 = inlined_call_operand.hbm [shape: bf16[2,16,16], index: 4, kind: input, shape index: {}]
  %s5 = inlined_call_operand.vmem [shape: f32[10,32], index: 5, kind: input, shape index: {}]
  %s6 = inlined_call_operand.hbm [shape: f32[32,32], index: 6, kind: input, shape index: {}]
  %s7 = inlined_call_operand.vmem [shape: f32[1,32], index: 7, kind: input, shape index: {}]
  %s8 = inlined_call_operand.hbm [shape: f32[2,16], index: 8, kind: output, shape index: {0}]
  %s9 = inlined_call_operand.hbm [shape: f32[2,16], index: 9, kind: output, shape index: {1}]
  %10 = xla_tuple %s8, %s9
  %s11 = sld [smem:[#allocation0]]
  $region78: #{tpu_custom_call.1} parent=0
    _
  %s13 = ssub.s32 1, %s11
  %s14 = scalar_select 0, %s13, %s11
  $region1: #{tpu_custom_call.1} parent=0
    #allocation5 [shape = 'u8[2048]{0}', space=vmem, size = 0x800, scoped, tag = 'input window, operand 0, single buffered']
    #allocation6 [shape = 's32[1]{0}', space=sflag, size = 0x4, scoped, tag = 'scoped memory for tpu_custom_call.1']
    #allocation7 [shape = 's32[1]{0}', space=sflag, size = 0x4, scoped, tag = 'scoped memory for tpu_custom_call.1']
    #allocation8 [shape = 'u8[8192]{0}', space=vmem, size = 0x2000, scoped, tag = 'input window, operand 2, single buffered']
    #allocation9 [shape = 's32[1]{0}', space=sflag, size = 0x4, scoped, tag = 'scoped memory for tpu_custom_call.1']
    #allocation10 [shape = 'u8[1024]{0}', space=vmem, size = 0x400, scoped, tag = 'input window, operand 3, single buffered']
    #allocation11 [shape = 'u8[8192]{0}', space=vmem, size = 0x2000, scoped, tag = 'input window, operand 4, single buffered']
    #allocation12 [shape = 's32[1]{0}', space=sflag, size = 0x4, scoped, tag = 'scoped memory for tpu_custom_call.1']
    #allocation13 [shape = 'u8[16384]{0}', space=vmem, size = 0x4000, scoped, tag = 'input window, operand 6, single buffered']
    #allocation14 [shape = 'u8[1024]{0}', space=vmem, size = 0x400, scoped, tag = 'output window, operand 0, single buffered']
    #allocation15 [shape = 'u8[1024]{0}', space=vmem, size = 0x400, scoped, tag = 'output window, operand 1, single buffered']
    #allocation16 [shape = 's32[1]{0}', space=sflag, size = 0x4, scoped, tag = 'scoped memory for tpu_custom_call.1']
    %15 = vsyncpa [#allocation6], 0
    %16 = vsyncpa [#allocation9], 0
    %17 = vsyncpa [#allocation12], 0
    %18 = vsyncpa [#allocation7], 0
    %19 = vsyncpa [#allocation16], 0
    // Predicated region
    $region2: #{tpu_custom_call.1} parent=1 // pred_check
      _
    $region3: #{tpu_custom_call.1} parent=1 // pred_check_branch
      %21 = sbr.rel (0) target = $region5
    $region4: #{tpu_custom_call.1} parent=1 // pred_region
      %s23 = ssub.s32 64, 64
      %24 = vsyncadd [#allocation6], %s23
      %s25 = sshll.u32 [#allocation5], 4
      %s26 = int_to_ptr.vmem [resolvable:$true] %s25
      %31 = dma.hbm_to_vmem [thread:$0]  %s0, 64, %s26, [#allocation6], 32, 32, 2
    $region5: #{tpu_custom_call.1} parent=1 // pred_fallthru
      _
    // Predicated region
    $region6: #{tpu_custom_call.1} parent=1 // pred_check
      _
    $region7: #{tpu_custom_call.1} parent=1 // pred_check_branch
      %33 = sbr.rel (0) target = $region9
    $region8: #{tpu_custom_call.1} parent=1 // pred_region
      _
    $region9: #{tpu_custom_call.1} parent=1 // pred_fallthru
      _
    // Predicated region
    $region10: #{tpu_custom_call.1} parent=1 // pred_check
      _
    $region11: #{tpu_custom_call.1} parent=1 // pred_check_branch
      %35 = sbr.rel (0) target = $region13
    $region12: #{tpu_custom_call.1} parent=1 // pred_region
      %s37 = ssub.s32 256, 256
      %38 = vsyncadd [#allocation9], %s37
      %s39 = sshll.u32 [#allocation8], 4
      %s40 = int_to_ptr.vmem [resolvable:$true] %s39
      %45 = dma.hbm_to_vmem [thread:$0]  %s2, 256, %s40, [#allocation9], 64, 64, 4
    $region13: #{tpu_custom_call.1} parent=1 // pred_fallthru
      _
    // Predicated region
    $region14: #{tpu_custom_call.1} parent=1 // pred_check
      _
    $region15: #{tpu_custom_call.1} parent=1 // pred_check_branch
      %47 = sbr.rel (0) target = $region17
    $region16: #{tpu_custom_call.1} parent=1 // pred_region
      %s49 = ssub.s32 32, 32
      %50 = vsyncadd [#allocation9], %s49
      %s52 = sshll.u32 [#allocation10], 4
      %s53 = int_to_ptr.vmem [resolvable:$true] %s52
      %55 = dma.hbm_to_vmem [thread:$0]  %s3, 32, %s53, [#allocation9]
    $region17: #{tpu_custom_call.1} parent=1 // pred_fallthru
      _
    // Predicated region
    $region18: #{tpu_custom_call.1} parent=1 // pred_check
      _
    $region19: #{tpu_custom_call.1} parent=1 // pred_check_branch
      %57 = sbr.rel (0) target = $region21
    $region20: #{tpu_custom_call.1} parent=1 // pred_region
      %s59 = ssub.s32 256, 256
      %60 = vsyncadd [#allocation12], %s59
      %s61 = sshll.u32 [#allocation11], 4
      %s62 = int_to_ptr.vmem [resolvable:$true] %s61
      %67 = dma.hbm_to_vmem [thread:$0]  %s4, 256, %s62, [#allocation12], 64, 64, 4
    $region21: #{tpu_custom_call.1} parent=1 // pred_fallthru
      _
    // Predicated region
    $region22: #{tpu_custom_call.1} parent=1 // pred_check
      _
    $region23: #{tpu_custom_call.1} parent=1 // pred_check_branch
      %69 = sbr.rel (0) target = $region25
    $region24: #{tpu_custom_call.1} parent=1 // pred_region
      _
    $region25: #{tpu_custom_call.1} parent=1 // pred_fallthru
      _
    // Predicated region
    $region26: #{tpu_custom_call.1} parent=1 // pred_check
      _
    $region27: #{tpu_custom_call.1} parent=1 // pred_check_branch
      %71 = sbr.rel (0) target = $region29
    $region28: #{tpu_custom_call.1} parent=1 // pred_region
      %s73 = ssub.s32 512, 512
      %74 = vsyncadd [#allocation12], %s73
      %s75 = sshll.u32 [#allocation13], 4
      %s76 = int_to_ptr.vmem [resolvable:$true] %s75
      %81 = dma.hbm_to_vmem [thread:$0]  %s6, 512, %s76, [#allocation12], 128, 128, 8
    $region29: #{tpu_custom_call.1} parent=1 // pred_fallthru
      _
    // Predicated region
    $region30: #{tpu_custom_call.1} parent=1 // pred_check
      _
    $region31: #{tpu_custom_call.1} parent=1 // pred_check_branch
      %83 = sbr.rel (0) target = $region33
    $region32: #{tpu_custom_call.1} parent=1 // pred_region
      _
    $region33: #{tpu_custom_call.1} parent=1 // pred_fallthru
      _
    // Predicated region
    $region34: #{tpu_custom_call.1} parent=1 // pred_check
      _
    $region35: #{tpu_custom_call.1} parent=1 // pred_check_branch
      %85 = sbr.rel (0) target = $region37
    $region36: #{tpu_custom_call.1} parent=1 // pred_region
      %86 = dma.done [#allocation6], 64
    $region37: #{tpu_custom_call.1} parent=1 // pred_fallthru
      _
    // Predicated region
    $region38: #{tpu_custom_call.1} parent=1 // pred_check
      _
    $region39: #{tpu_custom_call.1} parent=1 // pred_check_branch
      %88 = sbr.rel (0) target = $region41
    $region40: #{tpu_custom_call.1} parent=1 // pred_region
      %89 = dma.done [#allocation9], 256
    $region41: #{tpu_custom_call.1} parent=1 // pred_fallthru
      _
    // Predicated region
    $region42: #{tpu_custom_call.1} parent=1 // pred_check
      _
    $region43: #{tpu_custom_call.1} parent=1 // pred_check_branch
      %91 = sbr.rel (0) target = $region45
    $region44: #{tpu_custom_call.1} parent=1 // pred_region
      %92 = dma.done [#allocation9], 32
    $region45: #{tpu_custom_call.1} parent=1 // pred_fallthru
      _
    // Predicated region
    $region46: #{tpu_custom_call.1} parent=1 // pred_check
      _
    $region47: #{tpu_custom_call.1} parent=1 // pred_check_branch
      %94 = sbr.rel (0) target = $region49
    $region48: #{tpu_custom_call.1} parent=1 // pred_region
      %95 = dma.done [#allocation12], 256
    $region49: #{tpu_custom_call.1} parent=1 // pred_fallthru
      _
    // Predicated region
    $region50: #{tpu_custom_call.1} parent=1 // pred_check
      _
    $region51: #{tpu_custom_call.1} parent=1 // pred_check_branch
      %97 = sbr.rel (0) target = $region53
    $region52: #{tpu_custom_call.1} parent=1 // pred_region
      %98 = dma.done [#allocation12], 512
    $region53: #{tpu_custom_call.1} parent=1 // pred_fallthru
      _
    %p99 = scmp.eq.s32.totalorder 0, 0
    // Predicated region
    $region54: #{tpu_custom_call.1} parent=1 // pred_check
      %p100 = pneg %p99
    $region55: #{tpu_custom_call.1} parent=1 // pred_check_branch
      %102 = sbr.rel (%p100) target = $region57
    $region56: #{tpu_custom_call.1} parent=1 // pred_region
      %vm103 = vcmask 1024
      %104 = vst.msk [vmem:[#allocation2] sm:$0x3] %vm103, -1e+30
      %105 = vst.msk [vmem:[#allocation3] sm:$0x3] %vm103, 0.0
      %vm106 = vcmask 123904
      %107 = vst.msk [vmem:[#allocation14] sm:$0x3] %vm106, 0.0
      %v108 = vld [vmem:[%s1] sm:$0x3]
      %v109 = vld [vmem:[#allocation13] sm:$0xff]
      %v110 = vld [vmem:[#allocation13 + $0x8] sm:$0xff]
      %v111 = vld [vmem:[#allocation13 + $0x10] sm:$0xff]
      %v112 = vld [vmem:[#allocation13 + $0x18] sm:$0xff]
      %vm113 = vcmask 261120
      %v115 = vsel %vm113, %v108, 0
      %117 = vmatprep.subr.mxu0 0.0
      %118 = vmatpush1.msra.mxu0 %v109
      %119 = vmatprep.subr.mxu0 0.0
      %120 = vmatpush1.msra.mxu0 %v110
      %121 = vmatprep.subr.mxu0 0.0
      %122 = vmatpush1.msra.mxu0 %v111
      %123 = vmatprep.subr.mxu0 0.0
      %124 = vmatpush1.msra.mxu0 %v112
      %125 = vmatprep.subr.mxu0 0.0
      %126 = vmatpush1.msra.mxu0 0.0
      %127 = vmatprep.subr.mxu0 0.0
      %128 = vmatpush1.msra.mxu0 0.0
      %129 = vmatprep.subr.mxu0 0.0
      %130 = vmatpush1.msra.mxu0 0.0
      %131 = vmatprep.subr.mxu0 0.0
      %132 = vmatpush1.msra.mxu0 0.0
      %133 = vmatprep.subr.mxu0 0.0
      %134 = vmatpush1.msra.mxu0 0.0
      %135 = vmatprep.subr.mxu0 0.0
      %136 = vmatpush1.msra.mxu0 0.0
      %137 = vmatprep.subr.mxu0 0.0
      %138 = vmatpush1.msra.mxu0 0.0
      %139 = vmatprep.subr.mxu0 0.0
      %140 = vmatpush1.msra.mxu0 0.0
      %141 = vmatprep.subr.mxu0 0.0
      %142 = vmatpush1.msra.mxu0 0.0
      %143 = vmatprep.subr.mxu0 0.0
      %144 = vmatpush1.msra.mxu0 0.0
      %145 = vmatprep.subr.mxu0 0.0
      %146 = vmatpush1.msra.mxu0 0.0
      %147 = vmatprep.subr.mxu0 0.0
      %148 = vmatpush1.msra.mxu0 0.0
      %149 = vmatprep.subr.mxu0 0.0
      %150 = vmatpush1.msra.mxu0 0.0
      %151 = vmatprep.subr.mxu0 0.0
      %152 = vmatpush1.msra.mxu0 0.0
      %153 = vmatprep.subr.mxu0 0.0
      %154 = vmatpush1.msra.mxu0 0.0
      %155 = vmatprep.subr.mxu0 0.0
      %156 = vmatpush1.msra.mxu0 0.0
      %157 = vmatprep.subr.mxu0 0.0
      %158 = vmatpush1.msra.mxu0 0.0
      %159 = vmatprep.subr.mxu0 0.0
      %160 = vmatpush1.msra.mxu0 0.0
      %161 = vmatprep.subr.mxu0 0.0
      %162 = vmatpush1.msra.mxu0 0.0
      %163 = vmatprep.subr.mxu0 0.0
      %164 = vmatpush1.msra.mxu0 0.0
      %165 = vmatprep.subr.mxu0 0.0
      %166 = vmatpush1.msra.mxu0 0.0
      %167 = vmatprep.subr.mxu0 0.0
      %168 = vmatpush1.msra.mxu0 0.0
      %169 = vmatprep.subr.mxu0 0.0
      %170 = vmatpush1.msra.mxu0 0.0
      %171 = vmatprep.subr.mxu0 0.0
      %172 = vmatpush1.msra.mxu0 0.0
      %173 = vmatprep.subr.mxu0 0.0
      %174 = vmatpush1.msra.mxu0 0.0
      %175 = vmatprep.subr.mxu0 0.0
      %176 = vmatpush1.msra.mxu0 0.0
      %177 = vmatprep.subr.mxu0 0.0
      %178 = vmatpush1.msra.mxu0 0.0
      %179 = vmatprep.subr.mxu0 0.0
      %180 = vmatpush1.msra.mxu0 0.0
      %181 = vmatprep.mubr.f32.mxu0 0.0
      %182 = vmatmul.mubr.f32.gmra.mrb[0].mxu0 %v115
      %v183 = vpop.f32.mrb[0].mxu0
      %v184 = vadd.f32 0.0, %v183
      %v185 = vpop.f32.mrb[0].mxu0
      %186 = vdwg.mxu0
      %vm187 = vcmask 254976
      %188 = vst.msk [vmem:[#allocation4] sm:$0x3] %vm187, %v184
    $region57: #{tpu_custom_call.1} parent=1 // pred_fallthru
      _
    %v189 = vld [vmem:[#allocation5] sm:$0x3]
    %v190 = vld [vmem:[#allocation5 + $0x2] sm:$0x3]
    %v191 = vld [vmem:[%s5] sm:$0xff]
    %v192 = vld [vmem:[%s5 + $0x8] sm:$0x3]
    %v193 = vld [vmem:[#allocation8] sm:$0xf]
    %v194 = vld [vmem:[#allocation8 + $0x4] sm:$0xf]
    %v195 = vld [vmem:[#allocation8 + $0x8] sm:$0xf]
    %v196 = vld [vmem:[#allocation8 + $0xc] sm:$0xf]
    %v197 = vunpack.c.l.bf16 %v193
    %v198 = vunpack.c.l.bf16 %v194
    %v199 = vunpack.c.l.bf16 %v195
    %v200 = vunpack.c.l.bf16 %v196
    %v201 = vld [vmem:[#allocation4] sm:$0x3]
    %v204 = vunpack.c.l.s4 1966171168
    %v205 = vunpack.c.0.s8 %v204
    %v206 = vlaneseq
    %v207 = vshrl.u32 %v206, 7
    %v208 = vsub.s32 %v205, %v207
    %v209 = vrot.slane %v201, %v208
    %v210 = vcombine.high %v209, %v209
    %v212 = vunpack.c.l.s4 1966171168
    %v213 = vunpack.c.0.s8 %v212
    %v214 = vlaneseq
    %v215 = vshrl.u32 %v214, 7
    %v216 = vsub.s32 %v213, %v215
    %v217 = vrot.slane %v209, %v216
    %v219 = vunpack.c.l.s4 1966171168
    %v220 = vunpack.c.0.s8 %v219
    %v221 = vlaneseq
    %v222 = vshrl.u32 %v221, 7
    %v223 = vsub.s32 %v220, %v222
    %v224 = vrot.slane %v210, %v223
    %v225 = vlaneseq
    %v226 = vshrl.u32 %v225, 7
    %v227 = vsub.s32 0, %v226
    %v228 = vrot.slane %v217, %v227
    %v229 = vlaneseq
    %v230 = vshrl.u32 %v229, 7
    %v231 = vsub.s32 0, %v230
    %v232 = vrot.slane %v224, %v231
    %v235 = vadd.f32 %v197, %v228
    %v236 = vadd.f32 %v198, %v228
    %v237 = vadd.f32 %v199, %v232
    %v238 = vadd.f32 %v200, %v232
    %v239 = vlaneseq
    %v240 = vshrl.u32 %v239, 7
    %v241 = vsub.s32 0, %v240
    %v242 = vrot.slane %v189, %v241
    %244 = vbcast.lane.b32.xlu0 %v242, 256
    %v245 = vpop.permute.xlu0 %244
    %s247 = sor.u32 256, 8
    %248 = vbcast.lane.b32.xlu0 %v242, %s247
    %v249 = vpop.permute.xlu0 %248
    %v250 = vlaneseq
    %v251 = vshrl.u32 %v250, 7
    %v252 = vsub.s32 0, %v251
    %v253 = vrot.slane %v190, %v252
    %255 = vbcast.lane.b32.xlu0 %v253, 256
    %v256 = vpop.permute.xlu0 %255
    %s258 = sor.u32 256, 8
    %259 = vbcast.lane.b32.xlu0 %v253, %s258
    %v260 = vpop.permute.xlu0 %259
    %v261 = vlaneseq
    %v262 = vshrl.u32 %v261, 7
    %v263 = vsub.s32 0, %v262
    %v264 = vrot.slane %v191, %v263
    %v265 = vmul.f32 %v245, %v264
    %v266 = vmul.f32 %v249, %v264
    %v267 = vmul.f32 %v256, %v264
    %v268 = vmul.f32 %v260, %v264
    %v269 = vadd.f32 %v235, %v265
    %v270 = vadd.f32 %v236, %v266
    %v271 = vadd.f32 %v237, %v267
    %v272 = vadd.f32 %v238, %v268
    %s274 = sor.u32 256, 1
    %275 = vbcast.lane.b32.xlu0 %v242, %s274
    %v276 = vpop.permute.xlu0 %275
    %s278 = sor.u32 256, 9
    %279 = vbcast.lane.b32.xlu0 %v242, %s278
    %v280 = vpop.permute.xlu0 %279
    %s282 = sor.u32 256, 1
    %283 = vbcast.lane.b32.xlu0 %v253, %s282
    %v284 = vpop.permute.xlu0 %283
    %s286 = sor.u32 256, 9
    %287 = vbcast.lane.b32.xlu0 %v253, %s286
    %v288 = vpop.permute.xlu0 %287
    %v289 = vlaneseq
    %v290 = vshrl.u32 %v289, 7
    %v291 = vsub.s32 1, %v290
    %v292 = vrot.slane %v191, %v291
    %v293 = vmul.f32 %v276, %v292
    %v294 = vmul.f32 %v280, %v292
    %v295 = vmul.f32 %v284, %v292
    %v296 = vmul.f32 %v288, %v292
    %v297 = vadd.f32 %v269, %v293
    %v298 = vadd.f32 %v270, %v294
    %v299 = vadd.f32 %v271, %v295
    %v300 = vadd.f32 %v272, %v296
    %s302 = sor.u32 256, 2
    %303 = vbcast.lane.b32.xlu0 %v242, %s302
    %v304 = vpop.permute.xlu0 %303
    %s306 = sor.u32 256, 10
    %307 = vbcast.lane.b32.xlu0 %v242, %s306
    %v308 = vpop.permute.xlu0 %307
    %s310 = sor.u32 256, 2
    %311 = vbcast.lane.b32.xlu0 %v253, %s310
    %v312 = vpop.permute.xlu0 %311
    %s314 = sor.u32 256, 10
    %315 = vbcast.lane.b32.xlu0 %v253, %s314
    %v316 = vpop.permute.xlu0 %315
    %v317 = vlaneseq
    %v318 = vshrl.u32 %v317, 7
    %v319 = vsub.s32 2, %v318
    %v320 = vrot.slane %v191, %v319
    %v321 = vmul.f32 %v304, %v320
    %v322 = vmul.f32 %v308, %v320
    %v323 = vmul.f32 %v312, %v320
    %v324 = vmul.f32 %v316, %v320
    %v325 = vadd.f32 %v297, %v321
    %v326 = vadd.f32 %v298, %v322
    %v327 = vadd.f32 %v299, %v323
    %v328 = vadd.f32 %v300, %v324
    %s330 = sor.u32 256, 3
    %331 = vbcast.lane.b32.xlu0 %v242, %s330
    %v332 = vpop.permute.xlu0 %331
    %s334 = sor.u32 256, 11
    %335 = vbcast.lane.b32.xlu0 %v242, %s334
    %v336 = vpop.permute.xlu0 %335
    %s338 = sor.u32 256, 3
    %339 = vbcast.lane.b32.xlu0 %v253, %s338
    %v340 = vpop.permute.xlu0 %339
    %s342 = sor.u32 256, 11
    %343 = vbcast.lane.b32.xlu0 %v253, %s342
    %v344 = vpop.permute.xlu0 %343
    %v345 = vlaneseq
    %v346 = vshrl.u32 %v345, 7
    %v347 = vsub.s32 3, %v346
    %v348 = vrot.slane %v191, %v347
    %v349 = vmul.f32 %v332, %v348
    %v350 = vmul.f32 %v336, %v348
    %v351 = vmul.f32 %v340, %v348
    %v352 = vmul.f32 %v344, %v348
    %v353 = vadd.f32 %v325, %v349
    %v354 = vadd.f32 %v326, %v350
    %v355 = vadd.f32 %v327, %v351
    %v356 = vadd.f32 %v328, %v352
    %s358 = sor.u32 256, 4
    %359 = vbcast.lane.b32.xlu0 %v242, %s358
    %v360 = vpop.permute.xlu0 %359
    %s362 = sor.u32 256, 12
    %363 = vbcast.lane.b32.xlu0 %v242, %s362
    %v364 = vpop.permute.xlu0 %363
    %s366 = sor.u32 256, 4
    %367 = vbcast.lane.b32.xlu0 %v253, %s366
    %v368 = vpop.permute.xlu0 %367
    %s370 = sor.u32 256, 12
    %371 = vbcast.lane.b32.xlu0 %v253, %s370
    %v372 = vpop.permute.xlu0 %371
    %v373 = vlaneseq
    %v374 = vshrl.u32 %v373, 7
    %v375 = vsub.s32 4, %v374
    %v376 = vrot.slane %v191, %v375
    %v377 = vmul.f32 %v360, %v376
    %v378 = vmul.f32 %v364, %v376
    %v379 = vmul.f32 %v368, %v376
    %v380 = vmul.f32 %v372, %v376
    %v381 = vadd.f32 %v353, %v377
    %v382 = vadd.f32 %v354, %v378
    %v383 = vadd.f32 %v355, %v379
    %v384 = vadd.f32 %v356, %v380
    %v385 = vlaneseq
    %v386 = vshrl.u32 %v385, 7
    %v387 = vsub.s32 1, %v386
    %v388 = vrot.slane %v189, %v387
    %390 = vbcast.lane.b32.xlu0 %v388, 256
    %v391 = vpop.permute.xlu0 %390
    %s393 = sor.u32 256, 8
    %394 = vbcast.lane.b32.xlu0 %v388, %s393
    %v395 = vpop.permute.xlu0 %394
    %v396 = vlaneseq
    %v397 = vshrl.u32 %v396, 7
    %v398 = vsub.s32 1, %v397
    %v399 = vrot.slane %v190, %v398
    %401 = vbcast.lane.b32.xlu0 %v399, 256
    %v402 = vpop.permute.xlu0 %401
    %s404 = sor.u32 256, 8
    %405 = vbcast.lane.b32.xlu0 %v399, %s404
    %v406 = vpop.permute.xlu0 %405
    %v407 = vlaneseq
    %v408 = vshrl.u32 %v407, 7
    %v409 = vsub.s32 5, %v408
    %v410 = vrot.slane %v191, %v409
    %v411 = vmul.f32 %v391, %v410
    %v412 = vmul.f32 %v395, %v410
    %v413 = vmul.f32 %v402, %v410
    %v414 = vmul.f32 %v406, %v410
    %v415 = vadd.f32 %v381, %v411
    %v416 = vadd.f32 %v382, %v412
    %v417 = vadd.f32 %v383, %v413
    %v418 = vadd.f32 %v384, %v414
    %s420 = sor.u32 256, 1
    %421 = vbcast.lane.b32.xlu0 %v388, %s420
    %v422 = vpop.permute.xlu0 %421
    %s424 = sor.u32 256, 9
    %425 = vbcast.lane.b32.xlu0 %v388, %s424
    %v426 = vpop.permute.xlu0 %425
    %s428 = sor.u32 256, 1
    %429 = vbcast.lane.b32.xlu0 %v399, %s428
    %v430 = vpop.permute.xlu0 %429
    %s432 = sor.u32 256, 9
    %433 = vbcast.lane.b32.xlu0 %v399, %s432
    %v434 = vpop.permute.xlu0 %433
    %v435 = vlaneseq
    %v436 = vshrl.u32 %v435, 7
    %v437 = vsub.s32 6, %v436
    %v438 = vrot.slane %v191, %v437
    %v439 = vmul.f32 %v422, %v438
    %v440 = vmul.f32 %v426, %v438
    %v441 = vmul.f32 %v430, %v438
    %v442 = vmul.f32 %v434, %v438
    %v443 = vadd.f32 %v415, %v439
    %v444 = vadd.f32 %v416, %v440
    %v445 = vadd.f32 %v417, %v441
    %v446 = vadd.f32 %v418, %v442
    %s448 = sor.u32 256, 2
    %449 = vbcast.lane.b32.xlu0 %v388, %s448
    %v450 = vpop.permute.xlu0 %449
    %s452 = sor.u32 256, 10
    %453 = vbcast.lane.b32.xlu0 %v388, %s452
    %v454 = vpop.permute.xlu0 %453
    %s456 = sor.u32 256, 2
    %457 = vbcast.lane.b32.xlu0 %v399, %s456
    %v458 = vpop.permute.xlu0 %457
    %s460 = sor.u32 256, 10
    %461 = vbcast.lane.b32.xlu0 %v399, %s460
    %v462 = vpop.permute.xlu0 %461
    %v463 = vlaneseq
    %v464 = vshrl.u32 %v463, 7
    %v465 = vsub.s32 7, %v464
    %v466 = vrot.slane %v191, %v465
    %v467 = vmul.f32 %v450, %v466
    %v468 = vmul.f32 %v454, %v466
    %v469 = vmul.f32 %v458, %v466
    %v470 = vmul.f32 %v462, %v466
    %v471 = vadd.f32 %v443, %v467
    %v472 = vadd.f32 %v444, %v468
    %v473 = vadd.f32 %v445, %v469
    %v474 = vadd.f32 %v446, %v470
    %s476 = sor.u32 256, 3
    %477 = vbcast.lane.b32.xlu0 %v388, %s476
    %v478 = vpop.permute.xlu0 %477
    %s480 = sor.u32 256, 11
    %481 = vbcast.lane.b32.xlu0 %v388, %s480
    %v482 = vpop.permute.xlu0 %481
    %s484 = sor.u32 256, 3
    %485 = vbcast.lane.b32.xlu0 %v399, %s484
    %v486 = vpop.permute.xlu0 %485
    %s488 = sor.u32 256, 11
    %489 = vbcast.lane.b32.xlu0 %v399, %s488
    %v490 = vpop.permute.xlu0 %489
    %v491 = vlaneseq
    %v492 = vshrl.u32 %v491, 7
    %v493 = vsub.s32 0, %v492
    %v494 = vrot.slane %v192, %v493
    %v495 = vmul.f32 %v478, %v494
    %v496 = vmul.f32 %v482, %v494
    %v497 = vmul.f32 %v486, %v494
    %v498 = vmul.f32 %v490, %v494
    %v499 = vadd.f32 %v471, %v495
    %v500 = vadd.f32 %v472, %v496
    %v501 = vadd.f32 %v473, %v497
    %v502 = vadd.f32 %v474, %v498
    %s504 = sor.u32 256, 4
    %505 = vbcast.lane.b32.xlu0 %v388, %s504
    %v506 = vpop.permute.xlu0 %505
    %s508 = sor.u32 256, 12
    %509 = vbcast.lane.b32.xlu0 %v388, %s508
    %v510 = vpop.permute.xlu0 %509
    %s512 = sor.u32 256, 4
    %513 = vbcast.lane.b32.xlu0 %v399, %s512
    %v514 = vpop.permute.xlu0 %513
    %s516 = sor.u32 256, 12
    %517 = vbcast.lane.b32.xlu0 %v399, %s516
    %v518 = vpop.permute.xlu0 %517
    %v519 = vlaneseq
    %v520 = vshrl.u32 %v519, 7
    %v521 = vsub.s32 1, %v520
    %v522 = vrot.slane %v192, %v521
    %v523 = vmul.f32 %v506, %v522
    %v524 = vmul.f32 %v510, %v522
    %v525 = vmul.f32 %v514, %v522
    %v526 = vmul.f32 %v518, %v522
    %v527 = vadd.f32 %v499, %v523
    %v528 = vadd.f32 %v500, %v524
    %v529 = vadd.f32 %v501, %v525
    %v530 = vadd.f32 %v502, %v526
    %v531 = vtanh.pop %v527
    %v532 = vtanh.pop %v528
    %v533 = vtanh.pop %v529
    %v534 = vtanh.pop %v530
    %v535 = vld [vmem:[#allocation10] sm:$0x3]
    %v536 = vld [vmem:[%s7] sm:$0x1]
    %v538 = vlaneseq
    %v539 = vshrl.u32 %v538, 7
    %v540 = vsub.s32 0, %v539
    %v541 = vrot.slane %v536, %v540
    %v543 = vmul.f32 %v531, %v541
    %v544 = vmul.f32 %v532, %v541
    %v545 = vmul.f32 %v533, %v541
    %v546 = vmul.f32 %v534, %v541
    %vm547 = vcmask 261120
    %v548 = vsel %vm547, %v543, 0.0
    %549 = vadd.xlane.f32.xlu0 %v548
    %v550 = vpop.xlane.xlu0 %549
    %v551 = vsel %vm547, %v544, 0.0
    %552 = vadd.xlane.f32.xlu0 %v551
    %v553 = vpop.xlane.xlu0 %552
    %v554 = vsel %vm547, %v545, 0.0
    %555 = vadd.xlane.f32.xlu0 %v554
    %v556 = vpop.xlane.xlu0 %555
    %v557 = vsel %vm547, %v546, 0.0
    %558 = vadd.xlane.f32.xlu0 %v557
    %v559 = vpop.xlane.xlu0 %558
    %v561 = vlaneseq
    %v562 = vshrl.u32 %v561, 7
    %v563 = vsub.s32 0, %v562
    %v564 = vrot.slane %v535, %v563
    %566 = vbcast.lane.b32.xlu0 %v564, 256
    %v567 = vpop.permute.xlu0 %566
    %s569 = sor.u32 256, 8
    %570 = vbcast.lane.b32.xlu0 %v564, %s569
    %v571 = vpop.permute.xlu0 %570
    %v572 = vlaneseq
    %v573 = vshrl.u32 %v572, 7
    %v574 = vsub.s32 1, %v573
    %v575 = vrot.slane %v535, %v574
    %577 = vbcast.lane.b32.xlu0 %v575, 256
    %v578 = vpop.permute.xlu0 %577
    %s580 = sor.u32 256, 8
    %581 = vbcast.lane.b32.xlu0 %v575, %s580
    %v582 = vpop.permute.xlu0 %581
    %v587 = vadd.f32 %v550, %v567
    %v588 = vadd.f32 %v553, %v571
    %v589 = vadd.f32 %v556, %v578
    %v590 = vadd.f32 %v559, %v582
    %595 = vset.pattern.permute.xlu0 0
    %596 = vperm.xlu0 %595, %v587
    %v597 = vpop.permute.xlu0 %596
    %598 = vset.pattern.permute.xlu0 0
    %599 = vperm.xlu0 %598, %v588
    %v600 = vpop.permute.xlu0 %599
    %601 = vset.pattern.permute.xlu0 0
    %602 = vperm.xlu0 %601, %v589
    %v603 = vpop.permute.xlu0 %602
    %604 = vset.pattern.permute.xlu0 0
    %605 = vperm.xlu0 %604, %v590
    %v606 = vpop.permute.xlu0 %605
    %v607 = vlaneseq
    %v608 = vand.u32 %v607, 127
    %v609 = vlaneseq
    %v610 = vshrl.u32 %v609, 7
    %v611 = vsub.s32 %v608, %v610
    %v612 = vrot.slane %v597, %v611
    %v613 = vadd.s32 %v608, 4294967288
    %v614 = vlaneseq
    %v615 = vshrl.u32 %v614, 7
    %v616 = vsub.s32 %v613, %v615
    %v617 = vrot.slane %v600, %v616
    %vm618 = vcmask 130112
    %v619 = vsel %vm618, %v617, %v612
    %v620 = vlaneseq
    %v621 = vshrl.u32 %v620, 7
    %v622 = vsub.s32 %v608, %v621
    %v623 = vrot.slane %v603, %v622
    %v624 = vlaneseq
    %v625 = vshrl.u32 %v624, 7
    %v626 = vsub.s32 %v613, %v625
    %v627 = vrot.slane %v606, %v626
    %v628 = vsel %vm618, %v627, %v623
    %vm629 = vcmask 1041409
    %v630 = vsel %vm629, %v628, %v619
    %vm632 = vcmask 123904
    %633 = vst.msk [vmem:[#allocation15] sm:$0x3] %vm632, %v630
    %v634 = vld [vmem:[#allocation2] sm:$0x3]
    %v635 = vsel %vm632, %v630, -inf
    %636 = vmax.xlane.f32.xlu0 %v635
    %v637 = vpop.xlane.xlu0 %636
    %v638 = vmax.f32 %v634, %v637
    %v639 = vsub.f32 %v634, %v638
    %v640 = vmul.f32 %v639, 1.442695
    %v641 = vpow.pop %v640
    %vm642 = vcmp.lt.f32.partialorder %v535, -1e+20
    %644 = vset.pattern.permute.xlu0 0
    %645 = vperm.xlu0 %644, %v638
    %v646 = vpop.permute.xlu0 %645
    %v647 = vlaneseq
    %v648 = vshrl.u32 %v647, 7
    %v649 = vsub.s32 0, %v648
    %v650 = vrot.slane %v646, %v649
    %v651 = vlaneseq
    %v652 = vshrl.u32 %v651, 7
    %v653 = vsub.s32 1, %v652
    %v654 = vrot.slane %v646, %v653
    %v657 = vsub.f32 %v587, %v650
    %v658 = vsub.f32 %v588, %v650
    %v659 = vsub.f32 %v589, %v654
    %v660 = vsub.f32 %v590, %v654
    %v661 = vmul.f32 %v657, 1.442695
    %v662 = vpow.pop %v661
    %v663 = vmul.f32 %v658, 1.442695
    %v664 = vpow.pop %v663
    %v665 = vmul.f32 %v659, 1.442695
    %v666 = vpow.pop %v665
    %v667 = vmul.f32 %v660, 1.442695
    %v668 = vpow.pop %v667
    %673 = vset.pattern.permute.xlu0 0
    %674 = vperm.xlu0 %673, %v662
    %v675 = vpop.permute.xlu0 %674
    %676 = vset.pattern.permute.xlu0 0
    %677 = vperm.xlu0 %676, %v664
    %v678 = vpop.permute.xlu0 %677
    %679 = vset.pattern.permute.xlu0 0
    %680 = vperm.xlu0 %679, %v666
    %v681 = vpop.permute.xlu0 %680
    %682 = vset.pattern.permute.xlu0 0
    %683 = vperm.xlu0 %682, %v668
    %v684 = vpop.permute.xlu0 %683
    %v685 = vlaneseq
    %v686 = vshrl.u32 %v685, 7
    %v687 = vsub.s32 %v608, %v686
    %v688 = vrot.slane %v675, %v687
    %v689 = vlaneseq
    %v690 = vshrl.u32 %v689, 7
    %v691 = vsub.s32 %v613, %v690
    %v692 = vrot.slane %v678, %v691
    %v693 = vsel %vm618, %v692, %v688
    %v694 = vlaneseq
    %v695 = vshrl.u32 %v694, 7
    %v696 = vsub.s32 %v608, %v695
    %v697 = vrot.slane %v681, %v696
    %v698 = vlaneseq
    %v699 = vshrl.u32 %v698, 7
    %v700 = vsub.s32 %v613, %v699
    %v701 = vrot.slane %v684, %v700
    %v702 = vsel %vm618, %v701, %v697
    %v703 = vsel %vm629, %v702, %v693
    %v705 = vsel %vm642, 0.0, %v703
    %v706 = vld [vmem:[#allocation3] sm:$0x3]
    %v707 = vmul.f32 %v641, %v706
    %v708 = vsel %vm632, %v705, 0.0
    %709 = vadd.xlane.f32.xlu0 %v708
    %v710 = vpop.xlane.xlu0 %709
    %v711 = vadd.f32 %v707, %v710
    %vm712 = vcmask 1024
    %713 = vst.msk [vmem:[#allocation3] sm:$0x3] %vm712, %v711
    %v714 = vld [vmem:[#allocation14] sm:$0x3]
    %716 = vset.pattern.permute.xlu0 0
    %717 = vperm.xlu0 %716, %v641
    %v718 = vpop.permute.xlu0 %717
    %v720 = vmul.f32 %v718, %v714
    %v721 = vlaneseq
    %v722 = vshrl.u32 %v721, 7
    %v723 = vsub.s32 0, %v722
    %v724 = vrot.slane %v705, %v723
    %726 = vbcast.lane.b32.xlu0 %v724, 256
    %v727 = vpop.permute.xlu0 %726
    %s729 = sor.u32 256, 8
    %730 = vbcast.lane.b32.xlu0 %v724, %s729
    %v731 = vpop.permute.xlu0 %730
    %v732 = vlaneseq
    %v733 = vshrl.u32 %v732, 7
    %v734 = vsub.s32 1, %v733
    %v735 = vrot.slane %v705, %v734
    %737 = vbcast.lane.b32.xlu0 %v735, 256
    %v738 = vpop.permute.xlu0 %737
    %s740 = sor.u32 256, 8
    %741 = vbcast.lane.b32.xlu0 %v735, %s740
    %v742 = vpop.permute.xlu0 %741
    %v743 = vld [vmem:[#allocation11] sm:$0xf]
    %v744 = vld [vmem:[#allocation11 + $0x4] sm:$0xf]
    %v745 = vld [vmem:[#allocation11 + $0x8] sm:$0xf]
    %v746 = vld [vmem:[#allocation11 + $0xc] sm:$0xf]
    %v747 = vunpack.c.l.bf16 %v743
    %v748 = vunpack.c.l.bf16 %v744
    %v749 = vunpack.c.l.bf16 %v745
    %v750 = vunpack.c.l.bf16 %v746
    %v751 = vmul.f32 %v727, %v747
    %v752 = vmul.f32 %v731, %v748
    %v753 = vmul.f32 %v738, %v749
    %v754 = vmul.f32 %v742, %v750
    %vm755 = vcmask 130048
    %v756 = vsel %vm755, %v751, 0.0
    %v757 = vsel %vm755, %v752, 0.0
    %v758 = vadd.f32 %v756, %v757
    %v759 = vrot.slane %v758, 4
    %v760 = vadd.f32 %v758, %v759
    %v761 = vrot.slane %v760, 2
    %v762 = vadd.f32 %v760, %v761
    %v763 = vrot.slane %v762, 1
    %v764 = vadd.f32 %v762, %v763
    %v765 = vsel %vm755, %v753, 0.0
    %v766 = vsel %vm755, %v754, 0.0
    %v767 = vadd.f32 %v765, %v766
    %v768 = vrot.slane %v767, 4
    %v769 = vadd.f32 %v767, %v768
    %v770 = vrot.slane %v769, 2
    %v771 = vadd.f32 %v769, %v770
    %v772 = vrot.slane %v771, 1
    %v773 = vadd.f32 %v771, %v772
    %v776 = vsel %vm629, %v773, %v764
    %v778 = vadd.f32 %v720, %v776
    %779 = vst.msk [vmem:[#allocation14] sm:$0x3] %vm632, %v778
    %780 = vst.msk [vmem:[#allocation2] sm:$0x3] %vm712, %v638
    // Predicated region
    $region58: #{tpu_custom_call.1} parent=1 // pred_check
      %p781 = pneg %p99
    $region59: #{tpu_custom_call.1} parent=1 // pred_check_branch
      %783 = sbr.rel (%p781) target = $region61
    $region60: #{tpu_custom_call.1} parent=1 // pred_region
      %v784 = vld [vmem:[#allocation14] sm:$0x3]
      %v785 = vld [vmem:[#allocation3] sm:$0x3]
      %v786 = vrcp.pop %v785
      %788 = vset.pattern.permute.xlu0 0
      %789 = vperm.xlu0 %788, %v786
      %v790 = vpop.permute.xlu0 %789
      %v792 = vmul.f32 %v784, %v790
      %793 = vst.msk [vmem:[#allocation14] sm:$0x3] %vm632, %v792
    $region61: #{tpu_custom_call.1} parent=1 // pred_fallthru
      _
    // Predicated region
    $region62: #{tpu_custom_call.1} parent=1 // pred_check
      _
    $region63: #{tpu_custom_call.1} parent=1 // pred_check_branch
      %795 = sbr.rel (0) target = $region65
    $region64: #{tpu_custom_call.1} parent=1 // pred_region
      %s797 = ssub.s32 32, 32
      %798 = vsyncadd [#allocation7], %s797
      %s800 = sshll.u32 [#allocation14], 4
      %s801 = int_to_ptr.vmem [resolvable:$true] %s800
      %803 = dma.vmem_to_hbm [thread:$0]  %s801, 32, %s8, [#allocation7]
    $region65: #{tpu_custom_call.1} parent=1 // pred_fallthru
      _
    // Predicated region
    $region66: #{tpu_custom_call.1} parent=1 // pred_check
      _
    $region67: #{tpu_custom_call.1} parent=1 // pred_check_branch
      %805 = sbr.rel (0) target = $region69
    $region68: #{tpu_custom_call.1} parent=1 // pred_region
      %s807 = ssub.s32 32, 32
      %808 = vsyncadd [#allocation16], %s807
      %s810 = sshll.u32 [#allocation15], 4
      %s811 = int_to_ptr.vmem [resolvable:$true] %s810
      %813 = dma.vmem_to_hbm [thread:$0]  %s811, 32, %s9, [#allocation16]
    $region69: #{tpu_custom_call.1} parent=1 // pred_fallthru
      _
    // Predicated region
    $region70: #{tpu_custom_call.1} parent=1 // pred_check
      _
    $region71: #{tpu_custom_call.1} parent=1 // pred_check_branch
      %815 = sbr.rel (0) target = $region73
    $region72: #{tpu_custom_call.1} parent=1 // pred_region
      %816 = dma.done [#allocation7], 32
    $region73: #{tpu_custom_call.1} parent=1 // pred_fallthru
      _
    // Predicated region
    $region74: #{tpu_custom_call.1} parent=1 // pred_check
      _
    $region75: #{tpu_custom_call.1} parent=1 // pred_check_branch
      %818 = sbr.rel (0) target = $region77
    $region76: #{tpu_custom_call.1} parent=1 // pred_region
      %819 = dma.done [#allocation16], 32
    $region77: #{tpu_custom_call.1} parent=1 // pred_fallthru
      _
    %820 = vsyncpa [#allocation6], 1
    %821 = vsyncpa [#allocation9], 1
    %822 = vsyncpa [#allocation12], 1
    %823 = vsyncpa [#allocation7], 1
    %824 = vsyncpa [#allocation16], 1

</llo_original>
